<compile_context>
chip_gen: v6e
topology: v6e:2x2x1
jax: 0.10.0
libtpu: 0.0.40
codegen_flags: <defaults>
</compile_context>

<pallas_src>
import functools

import jax
import jax.numpy as jnp
from jax.experimental import pallas as pl
from jax.experimental.pallas import tpu as pltpu


def _layer_norm_kernel(x_ref, w_ref, b_ref, o_ref, *, eps):
    # x_ref block: (BB, C, TT); reduce over the channel axis (axis=1).
    x = x_ref[...].astype(jnp.float32)                    # (BB, C, TT)
    mu = jnp.mean(x, axis=1, keepdims=True)               # (BB, 1, TT) cross-sublane reduce
    r = x - mu
    sigma = jnp.mean(r * r, axis=1, keepdims=True)        # biased variance
    inv = jax.lax.rsqrt(sigma + eps)                      # EUP rsqrt (free slot)
    out = r * inv
    out = out * w_ref[...] + b_ref[...]                   # (C,1) f32 broadcasts over (BB,.,TT)
    o_ref[...] = out.astype(o_ref.dtype)


def _vmem_budget_bytes():
    """Returns (block byte budget, scoped vmem limit) derived from physical VMEM."""
    try:
        vmem = int(pltpu.get_tpu_info().vmem_capacity_bytes)
    except Exception:
        vmem = 64 << 20            # conservative fallback = v7x's 64 MiB per TC
    # Double-buffered in+out blocks capped at ~3/8 of physical VMEM; let the
    # compiler use up to ~3/4 (v5e/v6e: 48/96 MiB, v7x: 24/48 MiB).
    return (vmem * 3) // 8, (vmem * 3) // 4


def _choose_tiles(B, C, T, itemsize, budget_bytes, target_bytes=1 << 20):
    """Pick (BB, TT); double-buffered in+out block bytes ~= 4*BB*C*TT*itemsize."""

    def blk_bytes(bb, tt):
        return 4 * bb * C * tt * itemsize

    # ---- time tile: lane-dense multiple of 128 (or the full dim when T <= 128) ----
    if T <= 128:
        tt = T                                            # full-dim block is always legal
    else:
        t_full = pl.cdiv(T, 128) * 128                    # covers all of T in one tile
        max_tt = max(128, (budget_bytes // (4 * C * itemsize)) // 128 * 128)
        tt = min(max_tt, t_full)
        if tt < t_full and T % 128 == 0 and T % tt != 0:
            # prefer an even 128-multiple divisor of T (no ragged tail)
            d = tt
            while d > 128 and T % d != 0:
                d -= 128
            tt = d

    # ---- batch rows per block: amortize per-grid-step overhead for tiny C*TT ----
    bb = 1
    while (bb < B and B % (bb * 2) == 0
           and blk_bytes(bb, tt) < target_bytes
           and blk_bytes(bb * 2, tt) <= budget_bytes):
        bb *= 2
    return bb, tt


def layer_norm(x, mask, weight, bias, eps=1e-5):
    """x: (B, C, T), mask: (B, T) (pass-through). Returns (out, mask)."""
    B, C, T = x.shape
    budget, vmem_limit = _vmem_budget_bytes()
    bb, tt = _choose_tiles(B, C, T, jnp.dtype(x.dtype).itemsize, budget)
    grid = (pl.cdiv(B, bb), pl.cdiv(T, tt))
    # PyTorch params are (1, C, 1); keep them float32 (no round trip via x.dtype).
    w2 = weight.reshape(C, 1).astype(jnp.float32)
    b2 = bias.reshape(C, 1).astype(jnp.float32)
    out = pl.pallas_call(
        functools.partial(_layer_norm_kernel, eps=eps),
        out_shape=jax.ShapeDtypeStruct((B, C, T), x.dtype),
        grid_spec=pltpu.PrefetchScalarGridSpec(
            num_scalar_prefetch=0,
            grid=grid,
            in_specs=[
                pl.BlockSpec((bb, C, tt), lambda b, t: (b, 0, t)),   # x tile
                pl.BlockSpec((C, 1), lambda b, t: (0, 0)),           # weight (resident)
                pl.BlockSpec((C, 1), lambda b, t: (0, 0)),           # bias (resident)
            ],
            out_specs=pl.BlockSpec((bb, C, tt), lambda b, t: (b, 0, t)),
        ),
        compiler_params=pltpu.CompilerParams(
            dimension_semantics=("parallel", "parallel"),
            vmem_limit_bytes=int(vmem_limit)),
    )(x, w2, b2)
    # The PyTorch forward returns the mask untouched; no compute needed.
    return out, mask


def layer_norm_ref(x, mask, weight, bias, eps=1e-5):
    """Pure-JAX reference matching the PyTorch forward."""
    mu = jnp.mean(x, axis=1, keepdims=True)
    r = x - mu
    sigma = jnp.mean(r * r, axis=1, keepdims=True)
    out = r / jnp.sqrt(sigma + eps)
    out = out * weight.reshape(1, -1, 1) + bias.reshape(1, -1, 1)
    return out, mask


if __name__ == "__main__":
    key = jax.random.PRNGKey(0)
    k1, k2, k3 = jax.random.split(key, 3)

    B, C = 2, 32
    # Affine params (PyTorch default init is ones/zeros; perturb so the test is meaningful).
    weight = 1.0 + 0.1 * jax.random.normal(k2, (C,), jnp.float32)
    bias = 0.1 * jax.random.normal(k3, (C,), jnp.float32)

    ok = True
    for T in (256, 200):   # second case exercises the ragged (T % 128 != 0) path
        x = jax.random.normal(jax.random.fold_in(k1, T), (B, C, T), jnp.float32)
        lengths = jnp.array([T, T - 37])
        mask = jnp.arange(T)[None, :] >= lengths[:, None]   # (B, T) bool, True = padding

        y, mask_out = layer_norm(x, mask, weight, bias, eps=1e-5)
        y = jax.block_until_ready(y)

        y_ref, mask_ref = layer_norm_ref(x, mask, weight, bias, eps=1e-5)
        err = float(jnp.max(jnp.abs(y - y_ref)))
        ok = ok and bool(jnp.allclose(y, y_ref, atol=1e-4, rtol=1e-4))
        ok = ok and bool(jnp.all(mask_out == mask_ref))
        assert ok, f"T={T}: max abs err {err}"

    print("KERNEL_OK")
</pallas_src>

<mosaic_0001>
module attributes {stable_mosaic.version = 11 : i64} {
  func.func @_layer_norm_kernel(%arg0: i32, %arg1: i32, %arg2: memref<2x32x256xf32, #tpu.memory_space<vmem>>, %arg3: memref<32x1xf32, #tpu.memory_space<vmem>>, %arg4: memref<32x1xf32, #tpu.memory_space<vmem>>, %arg5: memref<2x32x256xf32, #tpu.memory_space<vmem>>) attributes {dimension_semantics = [#tpu.dimension_semantics<parallel>, #tpu.dimension_semantics<parallel>], iteration_bounds = array<i64: 1, 1>, scalar_prefetch = 0 : i64, scratch_operands = 0 : i64, tpu.core_type = #tpu.core_type<tc>, window_params = [{transform_indices = @transform_0, window_bounds = array<i64: 2, 32, 256>}, {pipeline_mode = #tpu.pipeline_mode<synchronous>, transform_indices = @transform_1, window_bounds = array<i64: 32, 1>}, {pipeline_mode = #tpu.pipeline_mode<synchronous>, transform_indices = @transform_2, window_bounds = array<i64: 32, 1>}, {transform_indices = @transform_3, window_bounds = array<i64: 2, 32, 256>}]} {
    %c0 = arith.constant 0 : index
    %c0_0 = arith.constant 0 : index
    %c0_1 = arith.constant 0 : index
    %0 = vector.load %arg2[%c0, %c0_0, %c0_1] : memref<2x32x256xf32, #tpu.memory_space<vmem>>, vector<2x32x256xf32>
    %cst = arith.constant dense<0.000000e+00> : vector<2x256xf32>
    %1 = vector.multi_reduction <add>, %0, %cst [1] : vector<2x32x256xf32> to vector<2x256xf32>
    %2 = vector.shape_cast %1 : vector<2x256xf32> to vector<2x1x256xf32>
    %cst_2 = arith.constant 3.200000e+01 : f32
    %3 = vector.broadcast %cst_2 : f32 to vector<2x1x256xf32>
    %4 = arith.divf %2, %3 : vector<2x1x256xf32>
    %5 = vector.broadcast %4 : vector<2x1x256xf32> to vector<2x32x256xf32>
    %6 = arith.subf %0, %5 : vector<2x32x256xf32>
    %7 = arith.mulf %6, %6 : vector<2x32x256xf32>
    %cst_3 = arith.constant dense<0.000000e+00> : vector<2x256xf32>
    %8 = vector.multi_reduction <add>, %7, %cst_3 [1] : vector<2x32x256xf32> to vector<2x256xf32>
    %9 = vector.shape_cast %8 : vector<2x256xf32> to vector<2x1x256xf32>
    %cst_4 = arith.constant 3.200000e+01 : f32
    %10 = vector.broadcast %cst_4 : f32 to vector<2x1x256xf32>
    %11 = arith.divf %9, %10 : vector<2x1x256xf32>
    %cst_5 = arith.constant 9.99999974E-6 : f32
    %12 = vector.broadcast %cst_5 : f32 to vector<2x1x256xf32>
    %13 = arith.addf %11, %12 : vector<2x1x256xf32>
    %14 = math.rsqrt %13 : vector<2x1x256xf32>
    %15 = vector.broadcast %14 : vector<2x1x256xf32> to vector<2x32x256xf32>
    %16 = arith.mulf %6, %15 : vector<2x32x256xf32>
    %c0_6 = arith.constant 0 : index
    %c0_7 = arith.constant 0 : index
    %17 = vector.load %arg3[%c0_6, %c0_7] : memref<32x1xf32, #tpu.memory_space<vmem>>, vector<32x1xf32>
    %18 = vector.shape_cast %17 : vector<32x1xf32> to vector<1x32x1xf32>
    %19 = vector.broadcast %18 : vector<1x32x1xf32> to vector<2x32x256xf32>
    %20 = arith.mulf %16, %19 : vector<2x32x256xf32>
    %c0_8 = arith.constant 0 : index
    %c0_9 = arith.constant 0 : index
    %21 = vector.load %arg4[%c0_8, %c0_9] : memref<32x1xf32, #tpu.memory_space<vmem>>, vector<32x1xf32>
    %22 = vector.shape_cast %21 : vector<32x1xf32> to vector<1x32x1xf32>
    %23 = vector.broadcast %22 : vector<1x32x1xf32> to vector<2x32x256xf32>
    %24 = arith.addf %20, %23 : vector<2x32x256xf32>
    %c0_10 = arith.constant 0 : index
    %c0_11 = arith.constant 0 : index
    %c0_12 = arith.constant 0 : index
    %25 = vector.load %arg5[%c0_10, %c0_11, %c0_12] : memref<2x32x256xf32, #tpu.memory_space<vmem>>, vector<2x32x256xf32>
    tpu.vector_store %arg5[%c0_10, %c0_11, %c0_12], %24 {strides = array<i32>} : memref<2x32x256xf32, #tpu.memory_space<vmem>>, vector<2x32x256xf32>,
    return
  }
  func.func @transform_0(%arg0: i32, %arg1: i32) -> (i32, i32, i32) {
    %c0_i32 = arith.constant 0 : i32
    %c0_i32_0 = arith.constant 0 : i32
    return %arg0, %c0_i32, %arg1 : i32, i32, i32
  }
  func.func @transform_1(%arg0: i32, %arg1: i32) -> (i32, i32) {
    %c0_i32 = arith.constant 0 : i32
    %c0_i32_0 = arith.constant 0 : i32
    %c0_i32_1 = arith.constant 0 : i32
    return %c0_i32, %c0_i32_0 : i32, i32
  }
  func.func @transform_2(%arg0: i32, %arg1: i32) -> (i32, i32) {
    %c0_i32 = arith.constant 0 : i32
    %c0_i32_0 = arith.constant 0 : i32
    %c0_i32_1 = arith.constant 0 : i32
    return %c0_i32, %c0_i32_0 : i32, i32
  }
  func.func @transform_3(%arg0: i32, %arg1: i32) -> (i32, i32, i32) {
    %c0_i32 = arith.constant 0 : i32
    %c0_i32_0 = arith.constant 0 : i32
    return %arg0, %c0_i32, %arg1 : i32, i32, i32
  }
}

</mosaic_0001>

<llo_original>
// kernel: tpu_custom_call.1
$region0: #{tpu_custom_call.1}
  #allocation0 [shape = 'u32[]', space=smem, size = 0x4, offset = 0x4, fixed_abs, tag = 'smem constant byte address 0x4 - core index']
  #allocation1 [shape = 'u32[144,128]{1,0:T(1,128)}', space=vmem, size = 0x12000, scoped, tag = 'internal scratch']
  %s0 = inlined_call_operand.hbm [shape: f32[2,32,256], index: 0, kind: input, shape index: {}]
  %s1 = inlined_call_operand.vmem [shape: f32[32,1], index: 1, kind: input, shape index: {}]
  %s2 = inlined_call_operand.vmem [shape: f32[32,1], index: 2, kind: input, shape index: {}]
  %s3 = inlined_call_operand.hbm [shape: f32[2,32,256], index: 3, kind: output, shape index: {}]
  %s4 = sld [smem:[#allocation0]]
  $region26: #{tpu_custom_call.1} parent=0
    _
  %s6 = ssub.s32 1, %s4
  %s7 = scalar_select 0, %s6, %s4
  $region1: #{tpu_custom_call.1} parent=0
    #allocation2 [shape = 'u8[65536]{0}', space=vmem, size = 0x10000, scoped, tag = 'input window, operand 0, single buffered']
    #allocation3 [shape = 's32[1]{0}', space=sflag, size = 0x4, scoped, tag = 'scoped memory for tpu_custom_call.1']
    #allocation4 [shape = 's32[1]{0}', space=sflag, size = 0x4, scoped, tag = 'scoped memory for tpu_custom_call.1']
    #allocation5 [shape = 'u8[65536]{0}', space=vmem, size = 0x10000, scoped, tag = 'output window, operand 0, single buffered']
    %8 = vsyncpa [#allocation3], 0
    %9 = vsyncpa [#allocation4], 0
    // Predicated region
    $region2: #{tpu_custom_call.1} parent=1 // pred_check
      _
    $region3: #{tpu_custom_call.1} parent=1 // pred_check_branch
      %11 = sbr.rel (0) target = $region5
    $region4: #{tpu_custom_call.1} parent=1 // pred_region
      %s13 = ssub.s32 2048, 2048
      %14 = vsyncadd [#allocation3], %s13
      %s15 = sshll.u32 [#allocation2], 4
      %s16 = int_to_ptr.vmem [resolvable:$true] %s15
      %21 = dma.hbm_to_vmem [thread:$0]  %s0, 2048, %s16, [#allocation3], 256, 256, 16
    $region5: #{tpu_custom_call.1} parent=1 // pred_fallthru
      _
    // Predicated region
    $region6: #{tpu_custom_call.1} parent=1 // pred_check
      _
    $region7: #{tpu_custom_call.1} parent=1 // pred_check_branch
      %23 = sbr.rel (0) target = $region9
    $region8: #{tpu_custom_call.1} parent=1 // pred_region
      _
    $region9: #{tpu_custom_call.1} parent=1 // pred_fallthru
      _
    // Predicated region
    $region10: #{tpu_custom_call.1} parent=1 // pred_check
      _
    $region11: #{tpu_custom_call.1} parent=1 // pred_check_branch
      %25 = sbr.rel (0) target = $region13
    $region12: #{tpu_custom_call.1} parent=1 // pred_region
      _
    $region13: #{tpu_custom_call.1} parent=1 // pred_fallthru
      _
    // Predicated region
    $region14: #{tpu_custom_call.1} parent=1 // pred_check
      _
    $region15: #{tpu_custom_call.1} parent=1 // pred_check_branch
      %27 = sbr.rel (0) target = $region17
    $region16: #{tpu_custom_call.1} parent=1 // pred_region
      %28 = dma.done [#allocation3], 2048
    $region17: #{tpu_custom_call.1} parent=1 // pred_fallthru
      _
    %v29 = vld [vmem:[#allocation2] sm:$0xff]
    %v30 = vld [vmem:[#allocation2 + $0x8] sm:$0xff]
    %v31 = vld [vmem:[#allocation2 + $0x10] sm:$0xff]
    %v32 = vld [vmem:[#allocation2 + $0x18] sm:$0xff]
    %v33 = vld [vmem:[#allocation2 + $0x20] sm:$0xff]
    %v34 = vld [vmem:[#allocation2 + $0x28] sm:$0xff]
    %v35 = vld [vmem:[#allocation2 + $0x30] sm:$0xff]
    %v36 = vld [vmem:[#allocation2 + $0x38] sm:$0xff]
    %v37 = vld [vmem:[#allocation2 + $0x40] sm:$0xff]
    %v38 = vld [vmem:[#allocation2 + $0x48] sm:$0xff]
    %v39 = vld [vmem:[#allocation2 + $0x50] sm:$0xff]
    %v40 = vld [vmem:[#allocation2 + $0x58] sm:$0xff]
    %v41 = vld [vmem:[#allocation2 + $0x60] sm:$0xff]
    %v42 = vld [vmem:[#allocation2 + $0x68] sm:$0xff]
    %v43 = vld [vmem:[#allocation2 + $0x70] sm:$0xff]
    %v44 = vld [vmem:[#allocation2 + $0x78] sm:$0xff]
    %v45 = vadd.f32 %v29, %v31
    %v46 = vadd.f32 %v45, %v33
    %v47 = vadd.f32 %v46, %v35
    %v48 = vrot.slane %v47, 4
    %v49 = vadd.f32 %v47, %v48
    %v50 = vrot.slane %v49, 2
    %v51 = vadd.f32 %v49, %v50
    %v52 = vrot.slane %v51, 1
    %v53 = vadd.f32 %v51, %v52
    %v54 = vadd.f32 %v30, %v32
    %v55 = vadd.f32 %v54, %v34
    %v56 = vadd.f32 %v55, %v36
    %v57 = vrot.slane %v56, 4
    %v58 = vadd.f32 %v56, %v57
    %v59 = vrot.slane %v58, 2
    %v60 = vadd.f32 %v58, %v59
    %v61 = vrot.slane %v60, 1
    %v62 = vadd.f32 %v60, %v61
    %v63 = vadd.f32 %v37, %v39
    %v64 = vadd.f32 %v63, %v41
    %v65 = vadd.f32 %v64, %v43
    %v66 = vrot.slane %v65, 4
    %v67 = vadd.f32 %v65, %v66
    %v68 = vrot.slane %v67, 2
    %v69 = vadd.f32 %v67, %v68
    %v70 = vrot.slane %v69, 1
    %v71 = vadd.f32 %v69, %v70
    %v72 = vadd.f32 %v38, %v40
    %v73 = vadd.f32 %v72, %v42
    %v74 = vadd.f32 %v73, %v44
    %v75 = vrot.slane %v74, 4
    %v76 = vadd.f32 %v74, %v75
    %v77 = vrot.slane %v76, 2
    %v78 = vadd.f32 %v76, %v77
    %v79 = vrot.slane %v78, 1
    %v80 = vadd.f32 %v78, %v79
    %v81 = vrcp.pop 32.0
    %v82 = vmul.f32 %v53, %v81
    %v83 = vmul.f32 %v62, %v81
    %v84 = vmul.f32 %v71, %v81
    %v85 = vmul.f32 %v80, %v81
    %v86 = vsub.f32 %v29, %v82
    %v87 = vsub.f32 %v30, %v83
    %v88 = vsub.f32 %v31, %v82
    %v89 = vsub.f32 %v32, %v83
    %v90 = vsub.f32 %v33, %v82
    %v91 = vsub.f32 %v34, %v83
    %v92 = vsub.f32 %v35, %v82
    %v93 = vsub.f32 %v36, %v83
    %v94 = vsub.f32 %v37, %v84
    %v95 = vsub.f32 %v38, %v85
    %v96 = vsub.f32 %v39, %v84
    %v97 = vsub.f32 %v40, %v85
    %v98 = vsub.f32 %v41, %v84
    %v99 = vsub.f32 %v42, %v85
    %v100 = vsub.f32 %v43, %v84
    %v101 = vsub.f32 %v44, %v85
    %v102 = vmul.f32 %v86, %v86
    %v103 = vmul.f32 %v87, %v87
    %v104 = vmul.f32 %v88, %v88
    %v105 = vmul.f32 %v89, %v89
    %v106 = vmul.f32 %v90, %v90
    %v107 = vmul.f32 %v91, %v91
    %v108 = vmul.f32 %v92, %v92
    %v109 = vmul.f32 %v93, %v93
    %v110 = vmul.f32 %v94, %v94
    %v111 = vmul.f32 %v95, %v95
    %v112 = vmul.f32 %v96, %v96
    %v113 = vmul.f32 %v97, %v97
    %v114 = vmul.f32 %v98, %v98
    %v115 = vmul.f32 %v99, %v99
    %v116 = vmul.f32 %v100, %v100
    %v117 = vmul.f32 %v101, %v101
    %v118 = vadd.f32 %v102, %v104
    %v119 = vadd.f32 %v118, %v106
    %v120 = vadd.f32 %v119, %v108
    %v121 = vrot.slane %v120, 4
    %v122 = vadd.f32 %v120, %v121
    %v123 = vrot.slane %v122, 2
    %v124 = vadd.f32 %v122, %v123
    %v125 = vrot.slane %v124, 1
    %v126 = vadd.f32 %v124, %v125
    %v127 = vadd.f32 %v103, %v105
    %v128 = vadd.f32 %v127, %v107
    %v129 = vadd.f32 %v128, %v109
    %v130 = vrot.slane %v129, 4
    %v131 = vadd.f32 %v129, %v130
    %v132 = vrot.slane %v131, 2
    %v133 = vadd.f32 %v131, %v132
    %v134 = vrot.slane %v133, 1
    %v135 = vadd.f32 %v133, %v134
    %v136 = vadd.f32 %v110, %v112
    %v137 = vadd.f32 %v136, %v114
    %v138 = vadd.f32 %v137, %v116
    %v139 = vrot.slane %v138, 4
    %v140 = vadd.f32 %v138, %v139
    %v141 = vrot.slane %v140, 2
    %v142 = vadd.f32 %v140, %v141
    %v143 = vrot.slane %v142, 1
    %v144 = vadd.f32 %v142, %v143
    %v145 = vadd.f32 %v111, %v113
    %v146 = vadd.f32 %v145, %v115
    %v147 = vadd.f32 %v146, %v117
    %v148 = vrot.slane %v147, 4
    %v149 = vadd.f32 %v147, %v148
    %v150 = vrot.slane %v149, 2
    %v151 = vadd.f32 %v149, %v150
    %v152 = vrot.slane %v151, 1
    %v153 = vadd.f32 %v151, %v152
    %v154 = vmul.f32 %v126, %v81
    %v155 = vmul.f32 %v135, %v81
    %v156 = vmul.f32 %v144, %v81
    %v157 = vmul.f32 %v153, %v81
    %v158 = vadd.f32 %v154, 1e-05
    %v159 = vadd.f32 %v155, 1e-05
    %v160 = vadd.f32 %v156, 1e-05
    %v161 = vadd.f32 %v157, 1e-05
    %v162 = vrsqrt.pop %v158
    %v163 = vrsqrt.pop %v159
    %v164 = vrsqrt.pop %v160
    %v165 = vrsqrt.pop %v161
    %v166 = vmul.f32 %v86, %v162
    %v167 = vmul.f32 %v87, %v163
    %v168 = vmul.f32 %v88, %v162
    %v169 = vmul.f32 %v89, %v163
    %v170 = vmul.f32 %v90, %v162
    %v171 = vmul.f32 %v91, %v163
    %v172 = vmul.f32 %v92, %v162
    %v173 = vmul.f32 %v93, %v163
    %v174 = vmul.f32 %v94, %v164
    %v175 = vmul.f32 %v95, %v165
    %v176 = vmul.f32 %v96, %v164
    %v177 = vmul.f32 %v97, %v165
    %v178 = vmul.f32 %v98, %v164
    %v179 = vmul.f32 %v99, %v165
    %v180 = vmul.f32 %v100, %v164
    %v181 = vmul.f32 %v101, %v165
    %v182 = vld [vmem:[%s1] sm:$0xff]
    %v183 = vld [vmem:[%s1 + $0x8] sm:$0xff]
    %v184 = vld [vmem:[%s1 + $0x10] sm:$0xff]
    %v185 = vld [vmem:[%s1 + $0x18] sm:$0xff]
    %187 = vset.pattern.permute.xlu0 0
    %188 = vperm.xlu0 %187, %v182
    %v189 = vpop.permute.xlu0 %188
    %192 = vset.pattern.permute.xlu0 0
    %193 = vperm.xlu0 %192, %v183
    %v194 = vpop.permute.xlu0 %193
    %197 = vset.pattern.permute.xlu0 0
    %198 = vperm.xlu0 %197, %v184
    %v199 = vpop.permute.xlu0 %198
    %202 = vset.pattern.permute.xlu0 0
    %203 = vperm.xlu0 %202, %v185
    %v204 = vpop.permute.xlu0 %203
    %v206 = vmul.f32 %v166, %v189
    %v207 = vmul.f32 %v167, %v189
    %v208 = vmul.f32 %v168, %v194
    %v209 = vmul.f32 %v169, %v194
    %v210 = vmul.f32 %v170, %v199
    %v211 = vmul.f32 %v171, %v199
    %v212 = vmul.f32 %v172, %v204
    %v213 = vmul.f32 %v173, %v204
    %v214 = vmul.f32 %v174, %v189
    %v215 = vmul.f32 %v175, %v189
    %v216 = vmul.f32 %v176, %v194
    %v217 = vmul.f32 %v177, %v194
    %v218 = vmul.f32 %v178, %v199
    %v219 = vmul.f32 %v179, %v199
    %v220 = vmul.f32 %v180, %v204
    %v221 = vmul.f32 %v181, %v204
    %v222 = vld [vmem:[%s2] sm:$0xff]
    %v223 = vld [vmem:[%s2 + $0x8] sm:$0xff]
    %v224 = vld [vmem:[%s2 + $0x10] sm:$0xff]
    %v225 = vld [vmem:[%s2 + $0x18] sm:$0xff]
    %227 = vset.pattern.permute.xlu0 0
    %228 = vperm.xlu0 %227, %v222
    %v229 = vpop.permute.xlu0 %228
    %232 = vset.pattern.permute.xlu0 0
    %233 = vperm.xlu0 %232, %v223
    %v234 = vpop.permute.xlu0 %233
    %237 = vset.pattern.permute.xlu0 0
    %238 = vperm.xlu0 %237, %v224
    %v239 = vpop.permute.xlu0 %238
    %242 = vset.pattern.permute.xlu0 0
    %243 = vperm.xlu0 %242, %v225
    %v244 = vpop.permute.xlu0 %243
    %v246 = vadd.f32 %v206, %v229
    %v247 = vadd.f32 %v207, %v229
    %v248 = vadd.f32 %v208, %v234
    %v249 = vadd.f32 %v209, %v234
    %v250 = vadd.f32 %v210, %v239
    %v251 = vadd.f32 %v211, %v239
    %v252 = vadd.f32 %v212, %v244
    %v253 = vadd.f32 %v213, %v244
    %v254 = vadd.f32 %v214, %v229
    %v255 = vadd.f32 %v215, %v229
    %v256 = vadd.f32 %v216, %v234
    %v257 = vadd.f32 %v217, %v234
    %v258 = vadd.f32 %v218, %v239
    %v259 = vadd.f32 %v219, %v239
    %v260 = vadd.f32 %v220, %v244
    %v261 = vadd.f32 %v221, %v244
    %262 = vst [vmem:[#allocation5] sm:$0xff] %v246
    %263 = vst [vmem:[#allocation5 + $0x8] sm:$0xff] %v247
    %264 = vst [vmem:[#allocation5 + $0x10] sm:$0xff] %v248
    %265 = vst [vmem:[#allocation5 + $0x18] sm:$0xff] %v249
    %266 = vst [vmem:[#allocation5 + $0x20] sm:$0xff] %v250
    %267 = vst [vmem:[#allocation5 + $0x28] sm:$0xff] %v251
    %268 = vst [vmem:[#allocation5 + $0x30] sm:$0xff] %v252
    %269 = vst [vmem:[#allocation5 + $0x38] sm:$0xff] %v253
    %270 = vst [vmem:[#allocation5 + $0x40] sm:$0xff] %v254
    %271 = vst [vmem:[#allocation5 + $0x48] sm:$0xff] %v255
    %272 = vst [vmem:[#allocation5 + $0x50] sm:$0xff] %v256
    %273 = vst [vmem:[#allocation5 + $0x58] sm:$0xff] %v257
    %274 = vst [vmem:[#allocation5 + $0x60] sm:$0xff] %v258
    %275 = vst [vmem:[#allocation5 + $0x68] sm:$0xff] %v259
    %276 = vst [vmem:[#allocation5 + $0x70] sm:$0xff] %v260
    %277 = vst [vmem:[#allocation5 + $0x78] sm:$0xff] %v261
    // Predicated region
    $region18: #{tpu_custom_call.1} parent=1 // pred_check
      _
    $region19: #{tpu_custom_call.1} parent=1 // pred_check_branch
      %279 = sbr.rel (0) target = $region21
    $region20: #{tpu_custom_call.1} parent=1 // pred_region
      %s281 = ssub.s32 2048, 2048
      %282 = vsyncadd [#allocation4], %s281
      %s283 = sshll.u32 [#allocation5], 4
      %s284 = int_to_ptr.vmem [resolvable:$true] %s283
      %289 = dma.vmem_to_hbm [thread:$0]  %s284, 2048, %s3, [#allocation4], 256, 256, 16
    $region21: #{tpu_custom_call.1} parent=1 // pred_fallthru
      _
    // Predicated region
    $region22: #{tpu_custom_call.1} parent=1 // pred_check
      _
    $region23: #{tpu_custom_call.1} parent=1 // pred_check_branch
      %291 = sbr.rel (0) target = $region25
    $region24: #{tpu_custom_call.1} parent=1 // pred_region
      %292 = dma.done [#allocation4], 2048
    $region25: #{tpu_custom_call.1} parent=1 // pred_fallthru
      _
    %293 = vsyncpa [#allocation3], 1
    %294 = vsyncpa [#allocation4], 1

</llo_original>
